<compile_context>
chip_gen: v5e
topology: v5e:2x2
jax: 0.10.0
libtpu: 0.0.40
codegen_flags: <defaults>
</compile_context>

<pallas_src>
import jax
import jax.numpy as jnp
from jax import lax
from jax.experimental import pallas as pl
from jax.experimental.pallas import tpu as pltpu


def _round_up(x, m):
    return ((x + m - 1) // m) * m


# --------------------- generation-aware scoped-VMEM budget ----------------------
_VMEM_LIMIT_CACHE = None


def _vmem_limit():
    """~3/4 of physical VMEM (≈96 MiB on v5e/v6e's 128 MiB, ≈48 MiB on v7x's 64 MiB)."""
    global _VMEM_LIMIT_CACHE
    if _VMEM_LIMIT_CACHE is None:
        try:
            cap = int(pltpu.get_tpu_info().vmem_capacity_bytes)
        except Exception:
            cap = 64 * 1024 * 1024
        _VMEM_LIMIT_CACHE = max(32 << 20, min((cap * 3) // 4, 100 << 20))
    return _VMEM_LIMIT_CACHE


# ----------- single-buffered resident blocks (pl.Buffered(1)) with probe --------
_BUFFERED1_OK = None


def _probe_copy_kernel(x_ref, o_ref):
    o_ref[...] = x_ref[...]


def _buffered1_supported():
    """Probe once whether pipeline_mode=pl.Buffered(1) lowers on this jax/libtpu."""
    global _BUFFERED1_OK
    if _BUFFERED1_OK is not None:
        return _BUFFERED1_OK
    try:
        x = jnp.zeros((8, 128), jnp.float32)
        fn = pl.pallas_call(
            _probe_copy_kernel,
            out_shape=jax.ShapeDtypeStruct((8, 128), jnp.float32),
            grid=(2,),
            in_specs=[pl.BlockSpec((8, 128), lambda i: (0, 0),
                                   pipeline_mode=pl.Buffered(1))],
            out_specs=pl.BlockSpec((8, 128), lambda i: (0, 0)),
        )
        jax.block_until_ready(fn(x))
        _BUFFERED1_OK = True
    except Exception:
        _BUFFERED1_OK = False
    return _BUFFERED1_OK


def _resident_spec(block_shape, index_map):
    """Constant-index (resident) blocks: single-buffer to halve their VMEM footprint."""
    if _buffered1_supported():
        return pl.BlockSpec(block_shape, index_map, pipeline_mode=pl.Buffered(1))
    return pl.BlockSpec(block_shape, index_map)


# --------------------------- matmul + bias kernel -------------------------------
# Used for (a) the layer-0 hoisted input projection over all Tp*Bp rows and (b) the FC head.
def _matmul_bias_kernel(x_ref, w_ref, b_ref, o_ref):
    acc = jnp.dot(x_ref[...].astype(w_ref.dtype), w_ref[...],
                  preferred_element_type=jnp.float32)
    o_ref[...] = (acc + b_ref[...]).astype(o_ref.dtype)


def matmul_bias(x, w, b, *, out_dtype):
    """x: (N, K) @ w: (K, M) + b: (1, M) -> (N, M). w is already transposed (MXU-native)."""
    N, K = x.shape
    M = w.shape[1]
    tm = N if N <= 1024 else 1024
    tn = M if M <= 2048 else 2048
    grid_m = pl.cdiv(N, tm)
    grid_n = pl.cdiv(M, tn)
    if grid_n == 1:                      # weight/bias resident -> single buffer
        w_spec = _resident_spec((K, tn), lambda i, j: (0, j))
        b_spec = _resident_spec((1, tn), lambda i, j: (0, j))
    else:                                # tiled over M -> keep default double buffering
        w_spec = pl.BlockSpec((K, tn), lambda i, j: (0, j))
        b_spec = pl.BlockSpec((1, tn), lambda i, j: (0, j))
    return pl.pallas_call(
        _matmul_bias_kernel,
        out_shape=jax.ShapeDtypeStruct((N, M), out_dtype),
        grid_spec=pltpu.PrefetchScalarGridSpec(
            num_scalar_prefetch=0,
            grid=(grid_m, grid_n),
            in_specs=[pl.BlockSpec((tm, K), lambda i, j: (i, 0)), w_spec, b_spec],
            out_specs=pl.BlockSpec((tm, tn), lambda i, j: (i, j)),
        ),
        compiler_params=pltpu.CompilerParams(
            dimension_semantics=("parallel", "parallel"),
            vmem_limit_bytes=_vmem_limit()),
    )(x, w, b)


# ----------------------------- LSTM recurrence kernel ---------------------------
# grid = (num_batch_tiles ["parallel"], Tp // tc ["arbitrary"]).  Per grid step: tc
# recurrence steps with bounded unroll; only h @ W_hh is inside the serial loop
# (x-projection precomputed).  Gate order in the packed weights is [i, f, o, g].
# Intermediate layers additionally compute the NEXT layer's input projection on the
# just-produced chunk (fused, chunk-level MXU matmul) instead of writing seq to HBM.
def _make_recurrence_kernel(tc, seq_len, needs_mask, fuse_next, unroll):
    def kernel(*refs):
        if fuse_next:
            (gx_ref, whh_ref, wihn_ref, bn_ref,
             gxn_ref, hfin_ref, h_sc, c_sc, seq_sc) = refs
        else:
            gx_ref, whh_ref, hfin_ref, h_sc, c_sc = refs

        @pl.when(pl.program_id(1) == 0)
        def _():
            h_sc[...] = jnp.zeros_like(h_sc)   # h_0 = 0
            c_sc[...] = jnp.zeros_like(c_sc)   # c_0 = 0

        w_hh = whh_ref[...]                    # (Hp, 4Hp), resident, pre-transposed
        Hp = h_sc.shape[-1]
        t_base = pl.program_id(1) * tc

        def step(t, carry):
            h, c = carry
            gates = gx_ref[t].astype(jnp.float32) + jnp.dot(
                h.astype(w_hh.dtype), w_hh, preferred_element_type=jnp.float32)
            # sigmoid(x) = 0.5*tanh(0.5*x)+0.5 : single EUP op per vreg for [i | f | o]
            sig = jnp.tanh(0.5 * gates[:, :3 * Hp]) * 0.5 + 0.5
            i_g = sig[:, 0 * Hp:1 * Hp]
            f_g = sig[:, 1 * Hp:2 * Hp]
            o_g = sig[:, 2 * Hp:3 * Hp]
            g_g = jnp.tanh(gates[:, 3 * Hp:4 * Hp])
            c_new = f_g * c + i_g * g_g
            h_new = o_g * jnp.tanh(c_new)
            if needs_mask:                     # freeze carries on padded timesteps
                valid = (t_base + t) < seq_len
                h_new = jnp.where(valid, h_new, h)
                c_new = jnp.where(valid, c_new, c)
            if fuse_next:
                seq_sc[t] = h_new
            return h_new, c_new

        h, c = lax.fori_loop(0, tc, step, (h_sc[...], c_sc[...]), unroll=unroll)
        h_sc[...] = h
        c_sc[...] = c

        if fuse_next:
            # Fused next-layer input projection on the whole (tc*bt)-row chunk.
            w_ihn = wihn_ref[...]              # (Hp, 4Hp_next), resident
            bt = seq_sc.shape[1]
            Gn = w_ihn.shape[1]
            flat = seq_sc[...].reshape(tc * bt, Hp).astype(w_ihn.dtype)
            gxn = jnp.dot(flat, w_ihn, preferred_element_type=jnp.float32) + bn_ref[...]
            gxn_ref[...] = gxn.reshape(tc, bt, Gn).astype(gxn_ref.dtype)

        @pl.when(pl.program_id(1) == pl.num_programs(1) - 1)
        def _():
            hfin_ref[...] = h.astype(hfin_ref.dtype)

    return kernel


def _batch_tile(Bp):
    """>=2 batch tiles when possible so the 'parallel' axis can use v7x's two TensorCores."""
    if Bp >= 16 and Bp % 16 == 0:
        return Bp // 2
    return Bp


def lstm_recurrence(gates_x, w_hh, *, tc, seq_len, out_dtype,
                    w_ih_next=None, b_next=None):
    """gates_x: (Tp, Bp, 4Hp) precomputed x-projection (bias included); w_hh: (Hp, 4Hp).

    Returns h_final (Bp, Hp), plus gx for the NEXT layer (Tp, Bp, 4Hp_next) when
    w_ih_next/b_next are given (fused intermediate layer)."""
    Tp, Bp, G = gates_x.shape
    Hp = w_hh.shape[0]
    fuse_next = w_ih_next is not None
    bt = _batch_tile(Bp)
    nb = Bp // bt
    nt = Tp // tc
    needs_mask = Tp != seq_len
    unroll = max(1, min(tc, 4))        # bounded unroll: LLO visibility without vreg spill
    kernel = _make_recurrence_kernel(tc, seq_len, needs_mask, fuse_next, unroll)

    hfin_sds = jax.ShapeDtypeStruct((Bp, Hp), out_dtype)
    hfin_spec = pl.BlockSpec((bt, Hp), lambda b, t: (b, 0))

    in_specs = [
        pl.BlockSpec((tc, bt, G), lambda b, t: (t, b, 0)),       # gx chunk (streamed)
        _resident_spec((Hp, G), lambda b, t: (0, 0)),            # W_hh resident
    ]
    scratch = [pltpu.VMEM((bt, Hp), jnp.float32),                # h carry
               pltpu.VMEM((bt, Hp), jnp.float32)]                # c carry
    args = [gates_x, w_hh]

    if fuse_next:
        Gn = w_ih_next.shape[1]
        in_specs += [_resident_spec((Hp, Gn), lambda b, t: (0, 0)),   # W_ih_{l+1}
                     _resident_spec((1, Gn), lambda b, t: (0, 0))]    # b_{l+1}
        out_shape = (jax.ShapeDtypeStruct((Tp, Bp, Gn), out_dtype), hfin_sds)
        out_specs = (pl.BlockSpec((tc, bt, Gn), lambda b, t: (t, b, 0)), hfin_spec)
        scratch += [pltpu.VMEM((tc, bt, Hp), jnp.float32)]            # seq chunk buffer
        args += [w_ih_next, b_next]
    else:
        out_shape = hfin_sds
        out_specs = hfin_spec

    res = pl.pallas_call(
        kernel,
        out_shape=out_shape,
        grid_spec=pltpu.PrefetchScalarGridSpec(
            num_scalar_prefetch=0,
            grid=(nb, nt),
            in_specs=in_specs,
            out_specs=out_specs,
            scratch_shapes=scratch),
        compiler_params=pltpu.CompilerParams(
            dimension_semantics=("parallel", "arbitrary"),
            vmem_limit_bytes=_vmem_limit()),
    )(*args)

    if fuse_next:
        return res[0], res[1]
    return res


# --------------------------------- parameters ------------------------------------
def init_params(key, input_size, hidden_size, num_layers, output_size):
    """PyTorch-layout parameters: W_ih:(4H,Din), W_hh:(4H,H), gate order [i,f,g,o],
    biases pre-summed into one (1,4H) row; fc_w:(O,H), fc_b:(1,O)."""
    k_lstm = 1.0 / jnp.sqrt(hidden_size)
    params = {"lstm": []}
    for layer in range(num_layers):
        d_in = input_size if layer == 0 else hidden_size
        key, k1, k2, k3, k4 = jax.random.split(key, 5)
        w_ih = jax.random.uniform(k1, (4 * hidden_size, d_in), jnp.float32, -k_lstm, k_lstm)
        w_hh = jax.random.uniform(k2, (4 * hidden_size, hidden_size), jnp.float32, -k_lstm, k_lstm)
        b_ih = jax.random.uniform(k3, (4 * hidden_size,), jnp.float32, -k_lstm, k_lstm)
        b_hh = jax.random.uniform(k4, (4 * hidden_size,), jnp.float32, -k_lstm, k_lstm)
        params["lstm"].append({"w_ih": w_ih, "w_hh": w_hh,
                               "b": (b_ih + b_hh).reshape(1, 4 * hidden_size)})
    key, k5, k6 = jax.random.split(key, 3)
    k_fc = 1.0 / jnp.sqrt(hidden_size)
    params["fc_w"] = jax.random.uniform(k5, (output_size, hidden_size), jnp.float32, -k_fc, k_fc)
    params["fc_b"] = jax.random.uniform(k6, (1, output_size), jnp.float32, -k_fc, k_fc)
    return params


def prepare_kernel_params(params, compute_dtype=jnp.bfloat16):
    """One-time weight prep: reorder gates [i,f,g,o]->[i,f,o,g], transpose to MXU-native
    layout, zero-pad hidden/output widths to lane multiples (128), cast to compute dtype.
    Zero pad columns/rows keep padded h/c lanes exactly 0 (sigmoid(0)*0 invariant)."""
    H = params["lstm"][0]["w_hh"].shape[1]
    Hp = _round_up(H, 128)
    O = params["fc_w"].shape[0]
    Op = _round_up(O, 128)

    perm = jnp.concatenate([jnp.arange(0, 2 * H),        # i, f
                            jnp.arange(3 * H, 4 * H),    # o
                            jnp.arange(2 * H, 3 * H)])   # g

    def pad_gate_cols(a):  # (R, 4H) -> (R, 4Hp), zero pad each gate block H -> Hp
        R = a.shape[0]
        a = a.reshape(R, 4, H)
        a = jnp.pad(a, ((0, 0), (0, 0), (0, Hp - H)))
        return a.reshape(R, 4 * Hp)

    layers = []
    for li, lyr in enumerate(params["lstm"]):
        w_ih = jnp.take(lyr["w_ih"], perm, axis=0).T     # (Din, 4H)  gates [i,f,o,g]
        w_hh = jnp.take(lyr["w_hh"], perm, axis=0).T     # (H,   4H)
        b = jnp.take(lyr["b"], perm, axis=1)             # (1,   4H)

        w_ih = pad_gate_cols(w_ih)                       # (Din, 4Hp)
        w_hh = pad_gate_cols(w_hh)                       # (H,   4Hp)
        b = pad_gate_cols(b)                             # (1,   4Hp)

        if li > 0:                                       # layer input is padded h (Hp wide)
            w_ih = jnp.pad(w_ih, ((0, Hp - H), (0, 0)))  # (Hp, 4Hp)
        w_hh = jnp.pad(w_hh, ((0, Hp - H), (0, 0)))      # (Hp, 4Hp)

        layers.append({"w_ih": w_ih.astype(compute_dtype),
                       "w_hh": w_hh.astype(compute_dtype),
                       "b": b.astype(jnp.float32)})

    fc_w = jnp.pad(params["fc_w"].T, ((0, Hp - H), (0, Op - O)))   # (Hp, Op)
    fc_b = jnp.pad(params["fc_b"], ((0, 0), (0, Op - O)))          # (1,  Op)

    return {"lstm": layers,
            "fc_w": fc_w.astype(compute_dtype),
            "fc_b": fc_b.astype(jnp.float32),
            "H": H, "Hp": Hp, "O": O, "Op": Op,
            "dtype": compute_dtype}


# --------------------------------- model wrapper ----------------------------------
def lstm_model_forward(x, kparams):
    """x: (B, T, input_size), batch_first like PyTorch.  Returns (num_layers*B, 1, output_size)."""
    B, T, _ = x.shape
    Bp = _round_up(B, 8)
    Hp, O, Op = kparams["Hp"], kparams["O"], kparams["Op"]
    cdt = kparams["dtype"]
    layers = kparams["lstm"]
    n_layers = len(layers)

    # time chunking: fixed tc, pad T and mask in-kernel (never falls back to tc=1)
    tc = min(T, 32)
    Tp = _round_up(T, tc)

    # single transpose to time-major; pad time and batch (zeros)
    x_tbd = jnp.transpose(x.astype(cdt), (1, 0, 2))                      # (T, B, Din)
    x_tbd = jnp.pad(x_tbd, ((0, Tp - T), (0, Bp - B), (0, 0)))           # (Tp, Bp, Din)
    d_in = x_tbd.shape[-1]

    # layer-0 input projection hoisted out of the recurrence: one big MXU matmul,
    # emitted in the compute dtype (bf16 when compute dtype is bf16)
    gx = matmul_bias(x_tbd.reshape(Tp * Bp, d_in), layers[0]["w_ih"], layers[0]["b"],
                     out_dtype=cdt).reshape(Tp, Bp, 4 * Hp)

    h_finals = []
    for li in range(n_layers):
        lyr = layers[li]
        if li < n_layers - 1:
            # intermediate layer: fuse next layer's input projection into the recurrence
            nxt = layers[li + 1]
            gx, h_fin = lstm_recurrence(gx, lyr["w_hh"], tc=tc, seq_len=T, out_dtype=cdt,
                                        w_ih_next=nxt["w_ih"], b_next=nxt["b"])
        else:
            # last layer: only h_final is needed (feeds the FC head)
            h_fin = lstm_recurrence(gx, lyr["w_hh"], tc=tc, seq_len=T, out_dtype=cdt)
        h_finals.append(h_fin)

    # h_out.view(-1, 1, H): stack per-layer final hidden states, drop batch/lane padding
    h_out = jnp.stack(h_finals, axis=0)[:, :B, :].reshape(n_layers * B, Hp)
    # Dropout(0.5) is identity at inference.  TODO(synk): training-mode dropout not implemented.
    out = matmul_bias(h_out, kparams["fc_w"], kparams["fc_b"], out_dtype=jnp.float32)
    return out[:, :O].reshape(n_layers * B, 1, O)


# ------------------------------ pure-JAX reference --------------------------------
def lstm_model_ref(x, params):
    x_tbd = jnp.transpose(x, (1, 0, 2))
    h_finals = []
    inp = x_tbd
    for layer in params["lstm"]:
        H = layer["w_hh"].shape[1]
        B = inp.shape[1]

        def step(carry, x_t):
            h, c = carry
            gates = x_t @ layer["w_ih"].T + h @ layer["w_hh"].T + layer["b"][0]
            i = jax.nn.sigmoid(gates[:, 0 * H:1 * H])
            f = jax.nn.sigmoid(gates[:, 1 * H:2 * H])
            g = jnp.tanh(gates[:, 2 * H:3 * H])
            o = jax.nn.sigmoid(gates[:, 3 * H:4 * H])
            c_new = f * c + i * g
            h_new = o * jnp.tanh(c_new)
            return (h_new, c_new), h_new

        (h_fin, _), seq = lax.scan(step,
                                   (jnp.zeros((B, H), jnp.float32),
                                    jnp.zeros((B, H), jnp.float32)), inp)
        inp = seq
        h_finals.append(h_fin)
    H = h_finals[0].shape[-1]
    h_out = jnp.stack(h_finals, axis=0).reshape(-1, H)
    out = h_out @ params["fc_w"].T + params["fc_b"]
    return out.reshape(-1, 1, out.shape[-1])


if __name__ == "__main__":
    input_size, hidden_size, num_layers, output_size = 4, 32, 2, 5
    batch, seq_len = 2, 8

    key = jax.random.PRNGKey(0)
    key, kx = jax.random.split(key)
    x = jax.random.normal(kx, (batch, seq_len, input_size), jnp.float32)
    params = init_params(key, input_size, hidden_size, num_layers, output_size)

    ref = lstm_model_ref(x, params)

    # f32 path: strict check against the pure-JAX reference
    kp_f32 = prepare_kernel_params(params, compute_dtype=jnp.float32)
    out = jax.block_until_ready(lstm_model_forward(x, kp_f32))
    assert out.shape == (num_layers * batch, 1, output_size), out.shape
    assert jnp.allclose(out, ref, atol=1e-3, rtol=1e-3), "f32 mismatch vs pure-JAX reference"

    # bf16 weights/activations (MXU-native, default), f32 gate math / carries: looser check
    kp_bf16 = prepare_kernel_params(params, compute_dtype=jnp.bfloat16)
    out_bf16 = jax.block_until_ready(lstm_model_forward(x, kp_bf16))
    assert out_bf16.shape == (num_layers * batch, 1, output_size), out_bf16.shape
    assert jnp.allclose(out_bf16.astype(jnp.float32), ref, atol=1e-1, rtol=1e-1), \
        "bf16 mismatch vs pure-JAX reference"

    print("KERNEL_OK")
</pallas_src>

<mosaic_0001>
module attributes {stable_mosaic.version = 11 : i64} {
  func.func @_probe_copy_kernel(%arg0: i32, %arg1: memref<8x128xf32, #tpu.memory_space<vmem>>, %arg2: memref<8x128xf32, #tpu.memory_space<vmem>>) attributes {dimension_semantics = [#tpu.dimension_semantics<arbitrary>], iteration_bounds = array<i64: 2>, scalar_prefetch = 0 : i64, scratch_operands = 0 : i64, tpu.core_type = #tpu.core_type<tc>, window_params = [{pipeline_mode = #tpu.pipeline_mode<synchronous>, transform_indices = @transform_0, window_bounds = array<i64: 8, 128>}, {pipeline_mode = #tpu.pipeline_mode<synchronous>, transform_indices = @transform_1, window_bounds = array<i64: 8, 128>}]} {
    %c0 = arith.constant 0 : index
    %c0_0 = arith.constant 0 : index
    %0 = vector.load %arg1[%c0, %c0_0] : memref<8x128xf32, #tpu.memory_space<vmem>>, vector<8x128xf32>
    %c0_1 = arith.constant 0 : index
    %c0_2 = arith.constant 0 : index
    %1 = vector.load %arg2[%c0_1, %c0_2] : memref<8x128xf32, #tpu.memory_space<vmem>>, vector<8x128xf32>
    tpu.vector_store %arg2[%c0_1, %c0_2], %0 {strides = array<i32>} : memref<8x128xf32, #tpu.memory_space<vmem>>, vector<8x128xf32>,
    return
  }
  func.func @transform_0(%arg0: i32) -> (i32, i32) {
    %c0_i32 = arith.constant 0 : i32
    %c0_i32_0 = arith.constant 0 : i32
    %c0_i32_1 = arith.constant 0 : i32
    return %c0_i32, %c0_i32_0 : i32, i32
  }
  func.func @transform_1(%arg0: i32) -> (i32, i32) {
    %c0_i32 = arith.constant 0 : i32
    %c0_i32_0 = arith.constant 0 : i32
    %c0_i32_1 = arith.constant 0 : i32
    return %c0_i32, %c0_i32_0 : i32, i32
  }
}

module attributes {stable_mosaic.version = 11 : i64} {
  func.func @_matmul_bias_kernel(%arg0: i32, %arg1: i32, %arg2: memref<64x4xf32, #tpu.memory_space<vmem>>, %arg3: memref<4x512xf32, #tpu.memory_space<vmem>>, %arg4: memref<1x512xf32, #tpu.memory_space<vmem>>, %arg5: memref<64x512xf32, #tpu.memory_space<vmem>>) attributes {dimension_semantics = [#tpu.dimension_semantics<parallel>, #tpu.dimension_semantics<parallel>], iteration_bounds = array<i64: 1, 1>, scalar_prefetch = 0 : i64, scratch_operands = 0 : i64, tpu.core_type = #tpu.core_type<tc>, window_params = [{transform_indices = @transform_0, window_bounds = array<i64: 64, 4>}, {transform_indices = @transform_1, window_bounds = array<i64: 4, 512>}, {transform_indices = @transform_2, window_bounds = array<i64: 1, 512>}, {transform_indices = @transform_3, window_bounds = array<i64: 64, 512>}]} {
    %c0 = arith.constant 0 : index
    %c0_0 = arith.constant 0 : index
    %0 = vector.load %arg2[%c0, %c0_0] : memref<64x4xf32, #tpu.memory_space<vmem>>, vector<64x4xf32>
    %c0_1 = arith.constant 0 : index
    %c0_2 = arith.constant 0 : index
    %1 = vector.load %arg3[%c0_1, %c0_2] : memref<4x512xf32, #tpu.memory_space<vmem>>, vector<4x512xf32>
    %cst = arith.constant dense<0.000000e+00> : vector<64x512xf32>
    %2 = tpu.matmul %0, %1, %cst {dimension_numbers = #tpu.dot_dimension_numbers<[1], [0], [0], [1], [0, 0, 1, 1], [], []>} : vector<64x4xf32>, vector<4x512xf32>, vector<64x512xf32> -> vector<64x512xf32>
    %c0_3 = arith.constant 0 : index
    %c0_4 = arith.constant 0 : index
    %3 = vector.load %arg4[%c0_3, %c0_4] : memref<1x512xf32, #tpu.memory_space<vmem>>, vector<1x512xf32>
    %4 = vector.broadcast %3 : vector<1x512xf32> to vector<64x512xf32>
    %5 = arith.addf %2, %4 : vector<64x512xf32>
    %c0_5 = arith.constant 0 : index
    %c0_6 = arith.constant 0 : index
    %6 = vector.load %arg5[%c0_5, %c0_6] : memref<64x512xf32, #tpu.memory_space<vmem>>, vector<64x512xf32>
    tpu.vector_store %arg5[%c0_5, %c0_6], %5 {strides = array<i32>} : memref<64x512xf32, #tpu.memory_space<vmem>>, vector<64x512xf32>,
    return
  }
  func.func @transform_0(%arg0: i32, %arg1: i32) -> (i32, i32) {
    %c0_i32 = arith.constant 0 : i32
    %c0_i32_0 = arith.constant 0 : i32
    return %arg0, %c0_i32 : i32, i32
  }
  func.func @transform_1(%arg0: i32, %arg1: i32) -> (i32, i32) {
    %c0_i32 = arith.constant 0 : i32
    %c0_i32_0 = arith.constant 0 : i32
    return %c0_i32, %arg1 : i32, i32
  }
  func.func @transform_2(%arg0: i32, %arg1: i32) -> (i32, i32) {
    %c0_i32 = arith.constant 0 : i32
    %c0_i32_0 = arith.constant 0 : i32
    return %c0_i32, %arg1 : i32, i32
  }
  func.func @transform_3(%arg0: i32, %arg1: i32) -> (i32, i32) {
    %c0_i32 = arith.constant 0 : i32
    return %arg0, %arg1 : i32, i32
  }
}

</mosaic_0001>

<llo_original>
// kernel: tpu_custom_call.1
$region0: #{tpu_custom_call.1}
  #allocation0 [shape = 'u32[]', space=smem, size = 0x4, offset = 0x4, fixed_abs, tag = 'smem constant byte address 0x4 - core index']
  #allocation1 [shape = 'u32[72,128]{1,0:T(1,128)}', space=vmem, size = 0x9000, scoped, tag = 'internal scratch']
  %s0 = inlined_call_operand.hbm [shape: f32[8,128], index: 0, kind: input, shape index: {}]
  %s1 = inlined_call_operand.hbm [shape: f32[8,128], index: 1, kind: output, shape index: {}]
  %s2 = sld [smem:[#allocation0]]
  $region41: #{tpu_custom_call.1} parent=0
    _
  %s4 = ssub.s32 1, %s2
  %s5 = scalar_select 0, %s4, %s2
  $region1: #{tpu_custom_call.1} parent=0
    #allocation2 [shape = 'u8[4096]{0}', space=vmem, size = 0x1000, scoped, tag = 'input window, operand 0, single buffered']
    #allocation3 [shape = 's32[2]{0}', space=sflag, size = 0x8, scoped, tag = 'scoped memory for tpu_custom_call.1']
    #allocation4 [shape = 's32[2]{0}', space=sflag, size = 0x8, scoped, tag = 'scoped memory for tpu_custom_call.1']
    #allocation5 [shape = 'u8[4096]{0}', space=vmem, size = 0x1000, scoped, tag = 'output window, operand 0, single buffered']
    %6 = vsyncpa [#allocation3], 0
    %7 = vsyncpa [#allocation4], 0
    loop: start=0, step=1, limit=4
    $region2: #{tpu_custom_call.1} parent=1 // loop_pre_header
      _
    $region3: #{tpu_custom_call.1} parent=1 // loop_header
      %s9 = sphi 0, %s13
      %p10 = scmp.ge.s32.totalorder %s9, 4
      %s17 = sphi 0, %s17
      %s19 = sphi 0, %s17
      %s20 = sphi 0, %s19
      %s34 = sphi 0, %s20
      %s38 = sphi 0, %s38
      %s40 = sphi 0, %s38
      %s41 = sphi 0, %s40
      %s55 = sphi 0, %s41
    $region4: #{tpu_custom_call.1} parent=1 // loop_header_branch
      %12 = sbr.rel (%p10) target = $region8
    $region5: #{tpu_custom_call.1} parent=1 // loop_body
      %s14 = ssub.s32 %s9, 1
      %s15 = ssub.s32 %s9, 2
      %s16 = sadd.s32 %s9, 1
      %s18 = sadd.s32 %s17, 1
      %p21 = scmp.eq.s32.totalorder %s9, 1
      %p22 = scmp.ne.s32.totalorder %s17, %s19
      %p23 = scmp.eq.s32.totalorder %s9, 0
      %p24 = por %p22, %p23
      %p25 = scmp.ne.s32.totalorder %s17, %s19
      %p26 = scmp.eq.s32.totalorder %s14, 1
      %p27 = por %p25, %p26
      %p28 = scmp.ne.s32.totalorder %s19, %s20
      %p29 = scmp.eq.s32.totalorder %s14, 0
      %p30 = por %p28, %p29
      %p31 = scmp.ne.s32.totalorder %s19, %s20
      %p32 = scmp.eq.s32.totalorder %s15, 1
      %p33 = por %p31, %p32
      %p35 = scmp.ne.s32.totalorder %s20, %s34
      %p36 = scmp.eq.s32.totalorder %s15, 0
      %p37 = por %p35, %p36
      %s39 = sadd.s32 %s38, 1
      %p42 = scmp.eq.s32.totalorder %s9, 1
      %p43 = scmp.ne.s32.totalorder %s38, %s40
      %p44 = scmp.eq.s32.totalorder %s9, 0
      %p45 = por %p43, %p44
      %p46 = scmp.ne.s32.totalorder %s38, %s40
      %p47 = scmp.eq.s32.totalorder %s14, 1
      %p48 = por %p46, %p47
      %p49 = scmp.ne.s32.totalorder %s40, %s41
      %p50 = scmp.eq.s32.totalorder %s14, 0
      %p51 = por %p49, %p50
      %p52 = scmp.ne.s32.totalorder %s40, %s41
      %p53 = scmp.eq.s32.totalorder %s15, 1
      %p54 = por %p52, %p53
      %p56 = scmp.ne.s32.totalorder %s41, %s55
      %p57 = scmp.eq.s32.totalorder %s15, 0
      %p58 = por %p56, %p57
      %p59 = scmp.le.s32.totalorder 1, %s9
      %p60 = scmp.lt.s32.totalorder %s9, 3
      %p61 = pnand %p59, %p60
      %p62 = pneg %p61
      // Predicated region
      $region9: #{tpu_custom_call.1} parent=5 // pred_check
        _
      $region10: #{tpu_custom_call.1} parent=5 // pred_check_branch
        %64 = sbr.rel (%p61) target = $region12
      $region11: #{tpu_custom_call.1} parent=5 // pred_region
        %s65 = ssub.s32 %s9, 1
        // Predicated region
        $region13: #{tpu_custom_call.1} parent=11 // pred_check
          %p66 = pneg %p30
        $region14: #{tpu_custom_call.1} parent=11 // pred_check_branch
          %68 = sbr.rel (%p66) target = $region16
        $region15: #{tpu_custom_call.1} parent=11 // pred_region
          %70 = vsyncadd [#allocation3], 0
          %s72 = sshll.u32 %s0, 4
          %s73 = int_to_ptr.hbm [resolvable:$true] %s72
          %s74 = sshll.u32 [#allocation2], 4
          %s75 = int_to_ptr.vmem [resolvable:$true] %s74
          %77 = dma.hbm_to_vmem [thread:$0]  %s73, 128, %s75, [#allocation3]
        $region16: #{tpu_custom_call.1} parent=11 // pred_fallthru
          _
      $region12: #{tpu_custom_call.1} parent=5 // pred_fallthru
        _
      %p78 = scmp.lt.s32.totalorder %s9, 2
      // Predicated region
      $region17: #{tpu_custom_call.1} parent=5 // pred_check
        %p79 = pneg %p78
      $region18: #{tpu_custom_call.1} parent=5 // pred_check_branch
        %81 = sbr.rel (%p79) target = $region20
      $region19: #{tpu_custom_call.1} parent=5 // pred_region
        _
      $region20: #{tpu_custom_call.1} parent=5 // pred_fallthru
        _
      %p82 = scmp.le.s32.totalorder 1, %s9
      %p83 = scmp.lt.s32.totalorder %s9, 3
      %p84 = pnand %p82, %p83
      %p85 = pneg %p84
      // Predicated region
      $region21: #{tpu_custom_call.1} parent=5 // pred_check
        _
      $region22: #{tpu_custom_call.1} parent=5 // pred_check_branch
        %87 = sbr.rel (%p84) target = $region24
      $region23: #{tpu_custom_call.1} parent=5 // pred_region
        %s88 = ssub.s32 %s9, 1
        // Predicated region
        $region25: #{tpu_custom_call.1} parent=23 // pred_check
          %p89 = pneg %p30
        $region26: #{tpu_custom_call.1} parent=23 // pred_check_branch
          %91 = sbr.rel (%p89) target = $region28
        $region27: #{tpu_custom_call.1} parent=23 // pred_region
          %93 = dma.done [#allocation3], 128
        $region28: #{tpu_custom_call.1} parent=23 // pred_fallthru
          _
        %p94 = pneg %p30
        %p95 = pneg %p27
        %p96 = pneg %p51
        %p97 = pneg %p48
        %v98 = vld [vmem:[#allocation2] sm:$0xff]
        %99 = vst [vmem:[#allocation5] sm:$0xff] %v98
        // Predicated region
        $region29: #{tpu_custom_call.1} parent=23 // pred_check
          %p100 = pneg %p48
        $region30: #{tpu_custom_call.1} parent=23 // pred_check_branch
          %102 = sbr.rel (%p100) target = $region32
        $region31: #{tpu_custom_call.1} parent=23 // pred_region
          %104 = vsyncadd [#allocation4], 0
          %s106 = sshll.u32 [#allocation5], 4
          %s107 = int_to_ptr.vmem [resolvable:$true] %s106
          %s108 = sshll.u32 %s1, 4
          %s109 = int_to_ptr.hbm [resolvable:$true] %s108
          %111 = dma.vmem_to_hbm [thread:$0]  %s107, 128, %s109, [#allocation4]
        $region32: #{tpu_custom_call.1} parent=23 // pred_fallthru
          _
        // Predicated region
        $region33: #{tpu_custom_call.1} parent=23 // pred_check
          %p112 = pneg %p48
        $region34: #{tpu_custom_call.1} parent=23 // pred_check_branch
          %114 = sbr.rel (%p112) target = $region36
        $region35: #{tpu_custom_call.1} parent=23 // pred_region
          %116 = dma.done [#allocation4], 128
        $region36: #{tpu_custom_call.1} parent=23 // pred_fallthru
          _
      $region24: #{tpu_custom_call.1} parent=5 // pred_fallthru
        _
      %p117 = scmp.le.s32.totalorder 2, %s9
      // Predicated region
      $region37: #{tpu_custom_call.1} parent=5 // pred_check
        %p118 = pneg %p117
      $region38: #{tpu_custom_call.1} parent=5 // pred_check_branch
        %120 = sbr.rel (%p118) target = $region40
      $region39: #{tpu_custom_call.1} parent=5 // pred_region
        %s121 = ssub.s32 %s9, 2
      $region40: #{tpu_custom_call.1} parent=5 // pred_fallthru
        _
    $region6: #{tpu_custom_call.1} parent=1 // loop_footer
      %s13 = sadd.s32 1, %s9
    $region7: #{tpu_custom_call.1} parent=1 // loop_footer_branch
      %8 = sbr.rel target = $region3
    $region8: #{tpu_custom_call.1} parent=1 // loop_exit
      _
    %122 = vsyncpa [#allocation3], 1
    %s123 = scalar_lea.sflag [#allocation3], 1
    %124 = vsyncpa %s123, 1
    %125 = vsyncpa [#allocation4], 1
    %s126 = scalar_lea.sflag [#allocation4], 1
    %127 = vsyncpa %s126, 1

// kernel: tpu_custom_call.1
$region0: #{tpu_custom_call.1}
  #allocation0 [shape = 'u32[]', space=smem, size = 0x4, offset = 0x4, fixed_abs, tag = 'smem constant byte address 0x4 - core index']
  #allocation1 [shape = 'u32[72,128]{1,0:T(1,128)}', space=vmem, size = 0x9000, scoped, tag = 'internal scratch']
  %s0 = inlined_call_operand.vmem [shape: f32[64,4], index: 0, kind: input, shape index: {}]
  %s1 = inlined_call_operand.vmem [shape: f32[4,512], index: 1, kind: input, shape index: {}]
  %s2 = inlined_call_operand.vmem [shape: f32[1,512], index: 2, kind: input, shape index: {}]
  %s3 = inlined_call_operand.hbm [shape: f32[64,512], index: 3, kind: output, shape index: {}]
  %s4 = sld [smem:[#allocation0]]
  $region22: #{tpu_custom_call.1} parent=0
    _
  %s6 = ssub.s32 1, %s4
  %s7 = scalar_select 0, %s6, %s4
  $region1: #{tpu_custom_call.1} parent=0
    #allocation2 [shape = 'u8[131072]{0}', space=vmem, size = 0x20000, scoped, tag = 'output window, operand 0, single buffered']
    #allocation3 [shape = 's32[1]{0}', space=sflag, size = 0x4, scoped, tag = 'scoped memory for tpu_custom_call.1']
    %8 = vsyncpa [#allocation3], 0
    // Predicated region
    $region2: #{tpu_custom_call.1} parent=1 // pred_check
      _
    $region3: #{tpu_custom_call.1} parent=1 // pred_check_branch
      %10 = sbr.rel (0) target = $region5
    $region4: #{tpu_custom_call.1} parent=1 // pred_region
      _
    $region5: #{tpu_custom_call.1} parent=1 // pred_fallthru
      _
    // Predicated region
    $region6: #{tpu_custom_call.1} parent=1 // pred_check
      _
    $region7: #{tpu_custom_call.1} parent=1 // pred_check_branch
      %12 = sbr.rel (0) target = $region9
    $region8: #{tpu_custom_call.1} parent=1 // pred_region
      _
    $region9: #{tpu_custom_call.1} parent=1 // pred_fallthru
      _
    // Predicated region
    $region10: #{tpu_custom_call.1} parent=1 // pred_check
      _
    $region11: #{tpu_custom_call.1} parent=1 // pred_check_branch
      %14 = sbr.rel (0) target = $region13
    $region12: #{tpu_custom_call.1} parent=1 // pred_region
      _
    $region13: #{tpu_custom_call.1} parent=1 // pred_fallthru
      _
    %v15 = vld [vmem:[%s0] sm:$0xff]
    %v16 = vld [vmem:[%s0 + $0x8] sm:$0xff]
    %v17 = vld [vmem:[%s0 + $0x10] sm:$0xff]
    %v18 = vld [vmem:[%s0 + $0x18] sm:$0xff]
    %v19 = vld [vmem:[%s0 + $0x20] sm:$0xff]
    %v20 = vld [vmem:[%s0 + $0x28] sm:$0xff]
    %v21 = vld [vmem:[%s0 + $0x30] sm:$0xff]
    %v22 = vld [vmem:[%s0 + $0x38] sm:$0xff]
    %v23 = vld [vmem:[%s1] sm:$0xff]
    %v24 = vld [vmem:[%s1 + $0x8] sm:$0xff]
    %v25 = vld [vmem:[%s2] sm:$0xf]
    %v27 = vperm.slane %v25, 0
    %v28 = vperm.slane %v25, 1
    %v29 = vperm.slane %v25, 2
    %v30 = vperm.slane %v25, 3
    %37 = vst [vmem:[#allocation1] ss:$2 sm:$0xff] %v23
    %s38 = scalar_lea.vmem [#allocation1], 16
    %39 = vst [vmem:[%s38] ss:$2 sm:$0xff] %v24
    %v40 = vld.sshfl [vmem:[#allocation1] sm:$0xff pattern:$0x75316420]
    %v41 = vld.sshfl [vmem:[#allocation1 + $0x8] sm:$0xff pattern:$0x75316420]
    %v42 = vld.sshfl [vmem:[#allocation1 + $0x10] sm:$0xff pattern:$0x75316420]
    %v43 = vld.sshfl [vmem:[#allocation1 + $0x18] sm:$0xff pattern:$0x75316420]
    %vm44 = vcmask 31744
    %v46 = vsel %vm44, %v15, 0
    %v49 = vsel %vm44, %v16, 0
    %v52 = vsel %vm44, %v17, 0
    %v55 = vsel %vm44, %v18, 0
    %v58 = vsel %vm44, %v19, 0
    %v61 = vsel %vm44, %v20, 0
    %v64 = vsel %vm44, %v21, 0
    %v67 = vsel %vm44, %v22, 0
    %vm69 = vcmask 1043456
    %v70 = vsel %vm69, %v40, 0
    %v72 = vsel %vm69, %v41, 0
    %v74 = vsel %vm69, %v42, 0
    %v76 = vsel %vm69, %v43, 0
    %78 = vmatpush.msra.mxu0 0.0
    %79 = vmatpush.msra.mxu0 0.0
    %80 = vmatpush.msra.mxu0 0.0
    %81 = vmatpush.msra.mxu0 0.0
    %82 = vmatpush.msra.mxu0 0.0
    %83 = vmatpush.msra.mxu0 0.0
    %84 = vmatpush.msra.mxu0 0.0
    %85 = vmatpush.msra.mxu0 0.0
    %86 = vmatpush.msra.mxu0 0.0
    %87 = vmatpush.msra.mxu0 0.0
    %88 = vmatpush.msra.mxu0 0.0
    %89 = vmatpush.msra.mxu0 0.0
    %90 = vmatpush.msra.mxu0 0.0
    %91 = vmatpush.msra.mxu0 0.0
    %92 = vmatpush.msra.mxu0 0.0
    %93 = vmatpush.msra.mxu0 %v70
    %94 = vmatmul.f32.gmra.mxu0 %v46
    %v95 = vpop.f32.mrf.mxu0
    %v96 = vadd.f32 %v27, %v95
    %97 = vmatmul.f32.gmra.mxu0 %v49
    %v98 = vpop.f32.mrf.mxu0
    %v99 = vadd.f32 %v27, %v98
    %100 = vmatmul.f32.gmra.mxu0 %v52
    %v101 = vpop.f32.mrf.mxu0
    %v102 = vadd.f32 %v27, %v101
    %103 = vmatmul.f32.gmra.mxu0 %v55
    %v104 = vpop.f32.mrf.mxu0
    %v105 = vadd.f32 %v27, %v104
    %106 = vmatmul.f32.gmra.mxu0 %v58
    %v107 = vpop.f32.mrf.mxu0
    %v108 = vadd.f32 %v27, %v107
    %109 = vmatmul.f32.gmra.mxu0 %v61
    %v110 = vpop.f32.mrf.mxu0
    %v111 = vadd.f32 %v27, %v110
    %112 = vmatmul.f32.gmra.mxu0 %v64
    %v113 = vpop.f32.mrf.mxu0
    %v114 = vadd.f32 %v27, %v113
    %115 = vmatmul.f32.gmra.mxu0 %v67
    %v116 = vpop.f32.mrf.mxu0
    %v117 = vadd.f32 %v27, %v116
    %118 = vdwg.mxu0
    %119 = vmatpush.msra.mxu0 0.0
    %120 = vmatpush.msra.mxu0 0.0
    %121 = vmatpush.msra.mxu0 0.0
    %122 = vmatpush.msra.mxu0 0.0
    %123 = vmatpush.msra.mxu0 0.0
    %124 = vmatpush.msra.mxu0 0.0
    %125 = vmatpush.msra.mxu0 0.0
    %126 = vmatpush.msra.mxu0 0.0
    %127 = vmatpush.msra.mxu0 0.0
    %128 = vmatpush.msra.mxu0 0.0
    %129 = vmatpush.msra.mxu0 0.0
    %130 = vmatpush.msra.mxu0 0.0
    %131 = vmatpush.msra.mxu0 0.0
    %132 = vmatpush.msra.mxu0 0.0
    %133 = vmatpush.msra.mxu0 0.0
    %134 = vmatpush.msra.mxu0 %v72
    %135 = vmatmul.f32.gmra.mxu0 %v46
    %v136 = vpop.f32.mrf.mxu0
    %v137 = vadd.f32 %v28, %v136
    %138 = vmatmul.f32.gmra.mxu0 %v49
    %v139 = vpop.f32.mrf.mxu0
    %v140 = vadd.f32 %v28, %v139
    %141 = vmatmul.f32.gmra.mxu0 %v52
    %v142 = vpop.f32.mrf.mxu0
    %v143 = vadd.f32 %v28, %v142
    %144 = vmatmul.f32.gmra.mxu0 %v55
    %v145 = vpop.f32.mrf.mxu0
    %v146 = vadd.f32 %v28, %v145
    %147 = vmatmul.f32.gmra.mxu0 %v58
    %v148 = vpop.f32.mrf.mxu0
    %v149 = vadd.f32 %v28, %v148
    %150 = vmatmul.f32.gmra.mxu0 %v61
    %v151 = vpop.f32.mrf.mxu0
    %v152 = vadd.f32 %v28, %v151
    %153 = vmatmul.f32.gmra.mxu0 %v64
    %v154 = vpop.f32.mrf.mxu0
    %v155 = vadd.f32 %v28, %v154
    %156 = vmatmul.f32.gmra.mxu0 %v67
    %v157 = vpop.f32.mrf.mxu0
    %v158 = vadd.f32 %v28, %v157
    %159 = vdwg.mxu0
    %160 = vmatpush.msra.mxu0 0.0
    %161 = vmatpush.msra.mxu0 0.0
    %162 = vmatpush.msra.mxu0 0.0
    %163 = vmatpush.msra.mxu0 0.0
    %164 = vmatpush.msra.mxu0 0.0
    %165 = vmatpush.msra.mxu0 0.0
    %166 = vmatpush.msra.mxu0 0.0
    %167 = vmatpush.msra.mxu0 0.0
    %168 = vmatpush.msra.mxu0 0.0
    %169 = vmatpush.msra.mxu0 0.0
    %170 = vmatpush.msra.mxu0 0.0
    %171 = vmatpush.msra.mxu0 0.0
    %172 = vmatpush.msra.mxu0 0.0
    %173 = vmatpush.msra.mxu0 0.0
    %174 = vmatpush.msra.mxu0 0.0
    %175 = vmatpush.msra.mxu0 %v74
    %176 = vmatmul.f32.gmra.mxu0 %v46
    %v177 = vpop.f32.mrf.mxu0
    %v178 = vadd.f32 %v29, %v177
    %179 = vmatmul.f32.gmra.mxu0 %v49
    %v180 = vpop.f32.mrf.mxu0
    %v181 = vadd.f32 %v29, %v180
    %182 = vmatmul.f32.gmra.mxu0 %v52
    %v183 = vpop.f32.mrf.mxu0
    %v184 = vadd.f32 %v29, %v183
    %185 = vmatmul.f32.gmra.mxu0 %v55
    %v186 = vpop.f32.mrf.mxu0
    %v187 = vadd.f32 %v29, %v186
    %188 = vmatmul.f32.gmra.mxu0 %v58
    %v189 = vpop.f32.mrf.mxu0
    %v190 = vadd.f32 %v29, %v189
    %191 = vmatmul.f32.gmra.mxu0 %v61
    %v192 = vpop.f32.mrf.mxu0
    %v193 = vadd.f32 %v29, %v192
    %194 = vmatmul.f32.gmra.mxu0 %v64
    %v195 = vpop.f32.mrf.mxu0
    %v196 = vadd.f32 %v29, %v195
    %197 = vmatmul.f32.gmra.mxu0 %v67
    %v198 = vpop.f32.mrf.mxu0
    %v199 = vadd.f32 %v29, %v198
    %200 = vdwg.mxu0
    %201 = vmatpush.msra.mxu0 0.0
    %202 = vmatpush.msra.mxu0 0.0
    %203 = vmatpush.msra.mxu0 0.0
    %204 = vmatpush.msra.mxu0 0.0
    %205 = vmatpush.msra.mxu0 0.0
    %206 = vmatpush.msra.mxu0 0.0
    %207 = vmatpush.msra.mxu0 0.0
    %208 = vmatpush.msra.mxu0 0.0
    %209 = vmatpush.msra.mxu0 0.0
    %210 = vmatpush.msra.mxu0 0.0
    %211 = vmatpush.msra.mxu0 0.0
    %212 = vmatpush.msra.mxu0 0.0
    %213 = vmatpush.msra.mxu0 0.0
    %214 = vmatpush.msra.mxu0 0.0
    %215 = vmatpush.msra.mxu0 0.0
    %216 = vmatpush.msra.mxu0 %v76
    %217 = vmatmul.f32.gmra.mxu0 %v46
    %v218 = vpop.f32.mrf.mxu0
    %v219 = vadd.f32 %v30, %v218
    %220 = vmatmul.f32.gmra.mxu0 %v49
    %v221 = vpop.f32.mrf.mxu0
    %v222 = vadd.f32 %v30, %v221
    %223 = vmatmul.f32.gmra.mxu0 %v52
    %v224 = vpop.f32.mrf.mxu0
    %v225 = vadd.f32 %v30, %v224
    %226 = vmatmul.f32.gmra.mxu0 %v55
    %v227 = vpop.f32.mrf.mxu0
    %v228 = vadd.f32 %v30, %v227
    %229 = vmatmul.f32.gmra.mxu0 %v58
    %v230 = vpop.f32.mrf.mxu0
    %v231 = vadd.f32 %v30, %v230
    %232 = vmatmul.f32.gmra.mxu0 %v61
    %v233 = vpop.f32.mrf.mxu0
    %v234 = vadd.f32 %v30, %v233
    %235 = vmatmul.f32.gmra.mxu0 %v64
    %v236 = vpop.f32.mrf.mxu0
    %v237 = vadd.f32 %v30, %v236
    %238 = vmatmul.f32.gmra.mxu0 %v67
    %v239 = vpop.f32.mrf.mxu0
    %v240 = vadd.f32 %v30, %v239
    %241 = vdwg.mxu0
    %242 = vst [vmem:[#allocation2] sm:$0xff] %v96
    %243 = vst [vmem:[#allocation2 + $0x8] sm:$0xff] %v137
    %244 = vst [vmem:[#allocation2 + $0x10] sm:$0xff] %v178
    %245 = vst [vmem:[#allocation2 + $0x18] sm:$0xff] %v219
    %246 = vst [vmem:[#allocation2 + $0x20] sm:$0xff] %v99
    %247 = vst [vmem:[#allocation2 + $0x28] sm:$0xff] %v140
    %248 = vst [vmem:[#allocation2 + $0x30] sm:$0xff] %v181
    %249 = vst [vmem:[#allocation2 + $0x38] sm:$0xff] %v222
    %250 = vst [vmem:[#allocation2 + $0x40] sm:$0xff] %v102
    %251 = vst [vmem:[#allocation2 + $0x48] sm:$0xff] %v143
    %252 = vst [vmem:[#allocation2 + $0x50] sm:$0xff] %v184
    %253 = vst [vmem:[#allocation2 + $0x58] sm:$0xff] %v225
    %254 = vst [vmem:[#allocation2 + $0x60] sm:$0xff] %v105
    %255 = vst [vmem:[#allocation2 + $0x68] sm:$0xff] %v146
    %256 = vst [vmem:[#allocation2 + $0x70] sm:$0xff] %v187
    %257 = vst [vmem:[#allocation2 + $0x78] sm:$0xff] %v228
    %258 = vst [vmem:[#allocation2 + $0x80] sm:$0xff] %v108
    %259 = vst [vmem:[#allocation2 + $0x88] sm:$0xff] %v149
    %260 = vst [vmem:[#allocation2 + $0x90] sm:$0xff] %v190
    %261 = vst [vmem:[#allocation2 + $0x98] sm:$0xff] %v231
    %262 = vst [vmem:[#allocation2 + $0xa0] sm:$0xff] %v111
    %263 = vst [vmem:[#allocation2 + $0xa8] sm:$0xff] %v152
    %264 = vst [vmem:[#allocation2 + $0xb0] sm:$0xff] %v193
    %265 = vst [vmem:[#allocation2 + $0xb8] sm:$0xff] %v234
    %266 = vst [vmem:[#allocation2 + $0xc0] sm:$0xff] %v114
    %267 = vst [vmem:[#allocation2 + $0xc8] sm:$0xff] %v155
    %268 = vst [vmem:[#allocation2 + $0xd0] sm:$0xff] %v196
    %269 = vst [vmem:[#allocation2 + $0xd8] sm:$0xff] %v237
    %270 = vst [vmem:[#allocation2 + $0xe0] sm:$0xff] %v117
    %271 = vst [vmem:[#allocation2 + $0xe8] sm:$0xff] %v158
    %272 = vst [vmem:[#allocation2 + $0xf0] sm:$0xff] %v199
    %273 = vst [vmem:[#allocation2 + $0xf8] sm:$0xff] %v240
    // Predicated region
    $region14: #{tpu_custom_call.1} parent=1 // pred_check
      _
    $region15: #{tpu_custom_call.1} parent=1 // pred_check_branch
      %275 = sbr.rel (0) target = $region17
    $region16: #{tpu_custom_call.1} parent=1 // pred_region
      %277 = vsyncadd [#allocation3], 0
      %s278 = sshll.u32 [#allocation2], 4
      %s279 = int_to_ptr.vmem [resolvable:$true] %s278
      %s280 = sshll.u32 %s3, 4
      %s281 = int_to_ptr.hbm [resolvable:$true] %s280
      %286 = dma.vmem_to_hbm [thread:$0]  %s279, 4096, %s281, [#allocation3], 512, 512, 32
    $region17: #{tpu_custom_call.1} parent=1 // pred_fallthru
      _
    // Predicated region
    $region18: #{tpu_custom_call.1} parent=1 // pred_check
      _
    $region19: #{tpu_custom_call.1} parent=1 // pred_check_branch
      %288 = sbr.rel (0) target = $region21
    $region20: #{tpu_custom_call.1} parent=1 // pred_region
      %290 = dma.done [#allocation3], 4096
    $region21: #{tpu_custom_call.1} parent=1 // pred_fallthru
      _
    %291 = vsyncpa [#allocation3], 1

</llo_original>
